<compile_context>
chip_gen: v7x
topology: tpu7x:2x2x1
jax: 0.10.0
libtpu: 0.0.40
codegen_flags: <defaults>
</compile_context>

<pallas_src>
import functools

import jax
import jax.numpy as jnp
from jax.experimental import pallas as pl
from jax.experimental.pallas import tpu as pltpu


K_PAD = 32          # 9*Cin = 27 zero-padded to a sublane-friendly K
BN_EPS = 1e-5


def _round_up(x, m):
    return (x + m - 1) // m * m


def _choose_tile_rows(hw, batch, streams=1, target_bytes=1 << 20):
    """Spatial rows per grid step.  Aim for ~1 MiB of bf16 patch data per step
    (past the HBM-roofline knee), clamp to [512, 2048] and to the problem size,
    keep a multiple of 8 (sublane) so the in-kernel leading-dim merge is free."""
    tr = target_bytes // (streams * batch * K_PAD * 2)
    tr = max(512, min(2048, tr))
    return _round_up(min(tr, hw), 8)


# ----------------------------------------------------------------------------
# Fused kernels
# ----------------------------------------------------------------------------

def _conv_bias_relu_gap(p3, cw, cb, row0, hw):
    """relu(patches @ W + b), mask padded rows, per-image row-sum.

    p3: (nb, tr, K_PAD) bf16 patch block (nb = batch, or 2*batch in depthwise).
    Returns (nb, FEAT) f32 partial GAP sums.  ONE MXU matmul per step, ONE bias
    broadcast; rows with global index >= hw are zeroed BEFORE the sum."""
    nb, tr, k = p3.shape
    feat = cw.shape[1]
    y = jnp.dot(p3.reshape(nb * tr, k), cw, preferred_element_type=jnp.float32)
    y = jnp.maximum(y + cb, 0.0)                       # bias + ReLU in f32
    y = y.reshape(nb, tr, feat)
    rows = jax.lax.broadcasted_iota(jnp.int32, (tr, 1), 0) + row0
    y = jnp.where((rows < hw)[None], y, 0.0)           # padding must not hit GAP
    return jnp.sum(y, axis=1)                          # (nb, FEAT)


def _fused_sbs_kernel(p_ref, cw_ref, cb_ref, lw_ref, lb_ref, g_ref, bt_ref,
                      o_ref, acc_ref, *, hw, tile_rows):
    t = pl.program_id(0)

    @pl.when(t == 0)
    def _init():
        acc_ref[...] = jnp.zeros_like(acc_ref)

    acc_ref[...] += _conv_bias_relu_gap(p_ref[...], cw_ref[...], cb_ref[...],
                                        t * tile_rows, hw)

    @pl.when(t == pl.num_programs(0) - 1)
    def _finalize():
        feats = acc_ref[...] * (1.0 / float(hw))       # global average pool
        y = jnp.dot(feats, lw_ref[...], preferred_element_type=jnp.float32)
        y = y + lb_ref[...]
        mu = jnp.mean(y, axis=0, keepdims=True)
        var = jnp.mean((y - mu) ** 2, axis=0, keepdims=True)  # biased variance
        o_ref[...] = g_ref[...] * (y - mu) * jax.lax.rsqrt(var + BN_EPS) + bt_ref[...]


def _fused_dw_kernel(pa_ref, pb_ref, cw_ref, cb_ref, wa_ref, wb_ref, lb_ref,
                     o_ref, acc_ref, *, hw, tile_rows, batch):
    t = pl.program_id(0)

    @pl.when(t == 0)
    def _init():
        acc_ref[...] = jnp.zeros_like(acc_ref)

    # Both streams folded into a single matmul per step (conv_w loaded once).
    p = jnp.concatenate([pa_ref[...], pb_ref[...]], axis=0)      # (2B, tr, K)
    acc_ref[...] += _conv_bias_relu_gap(p, cw_ref[...], cb_ref[...],
                                        t * tile_rows, hw)

    @pl.when(t == pl.num_programs(0) - 1)
    def _finalize():
        feats = acc_ref[...] * (1.0 / float(hw))                 # (2B, FEAT)
        fa = feats[:batch]
        fb = feats[batch:]
        # Linear(concat(fa, fb)) == fa @ W_top + fb @ W_bot + b
        y = jnp.dot(fa, wa_ref[...], preferred_element_type=jnp.float32)
        y = y + jnp.dot(fb, wb_ref[...], preferred_element_type=jnp.float32)
        o_ref[...] = y + lb_ref[...]


# ----------------------------------------------------------------------------
# pallas_call wrappers
# ----------------------------------------------------------------------------

def _const2d(shape):
    return pl.BlockSpec(shape, lambda t: (0, 0))


def _compiler_params():
    # Single grid axis = GAP reduction feeding the fused head -> "arbitrary".
    return pltpu.CompilerParams(
        dimension_semantics=("arbitrary",),
        vmem_limit_bytes=32 * 1024 * 1024,   # explicit: v5e default 16 MiB scoped;
                                             # v7x physical VMEM is only 64 MiB.
    )


def _cost_estimate(batch, hw, feat, embed, streams):
    flops = (2 * streams * batch * hw * K_PAD * feat
             + 2 * streams * batch * feat * embed)
    bytes_accessed = (streams * batch * hw * K_PAD * 2      # bf16 patches
                      + K_PAD * feat * 2                    # conv weight (bf16)
                      + streams * feat * embed * 4          # head weight(s)
                      + batch * embed * 4)                  # output
    return pl.CostEstimate(flops=flops, transcendentals=0,
                           bytes_accessed=bytes_accessed)


def fused_encode_side_by_side(patches, conv_w, conv_b, lin_w, lin_b, gamma, beta,
                              *, hw, tile_rows):
    batch, hw_pad, k = patches.shape
    feat = conv_w.shape[1]
    embed = lin_w.shape[1]
    kernel = functools.partial(_fused_sbs_kernel, hw=hw, tile_rows=tile_rows)
    return pl.pallas_call(
        kernel,
        out_shape=jax.ShapeDtypeStruct((batch, embed), jnp.float32),
        grid_spec=pltpu.PrefetchScalarGridSpec(
            num_scalar_prefetch=0,
            grid=(hw_pad // tile_rows,),
            in_specs=[
                pl.BlockSpec((batch, tile_rows, k), lambda t: (0, t, 0)),
                _const2d((k, feat)),
                _const2d((1, feat)),
                _const2d((feat, embed)),
                _const2d((1, embed)),
                _const2d((1, embed)),
                _const2d((1, embed)),
            ],
            out_specs=_const2d((batch, embed)),
            scratch_shapes=[pltpu.VMEM((batch, feat), jnp.float32)],
        ),
        compiler_params=_compiler_params(),
        cost_estimate=_cost_estimate(batch, hw, feat, embed, streams=1),
    )(patches, conv_w, conv_b, lin_w, lin_b, gamma, beta)


def fused_encode_depthwise(patches_a, patches_b, conv_w, conv_b,
                           wcat_a, wcat_b, lcat_b, *, hw, tile_rows):
    batch, hw_pad, k = patches_a.shape
    feat = conv_w.shape[1]
    embed = wcat_a.shape[1]
    kernel = functools.partial(_fused_dw_kernel, hw=hw, tile_rows=tile_rows,
                               batch=batch)
    return pl.pallas_call(
        kernel,
        out_shape=jax.ShapeDtypeStruct((batch, embed), jnp.float32),
        grid_spec=pltpu.PrefetchScalarGridSpec(
            num_scalar_prefetch=0,
            grid=(hw_pad // tile_rows,),
            in_specs=[
                pl.BlockSpec((batch, tile_rows, k), lambda t: (0, t, 0)),
                pl.BlockSpec((batch, tile_rows, k), lambda t: (0, t, 0)),
                _const2d((k, feat)),
                _const2d((1, feat)),
                _const2d((feat, embed)),
                _const2d((feat, embed)),
                _const2d((1, embed)),
            ],
            out_specs=_const2d((batch, embed)),
            scratch_shapes=[pltpu.VMEM((2 * batch, feat), jnp.float32)],
        ),
        compiler_params=_compiler_params(),
        cost_estimate=_cost_estimate(batch, hw, feat, embed, streams=2),
    )(patches_a, patches_b, conv_w, conv_b, wcat_a, wcat_b, lcat_b)


# ----------------------------------------------------------------------------
# im2col (XLA glue) and the EncoderCNN forward
# ----------------------------------------------------------------------------

def _im2col_3x3(x_nchw, k_pad, row_multiple):
    """NCHW -> [B, round_up(H*W, row_multiple), k_pad] bf16 patches for a
    3x3 / stride-1 / pad-1 conv.  Patch index = (ki*3+kj)*Cin + c; zero-padded
    along K and along rows (padded rows are masked inside the kernel)."""
    b, c, h, w = x_nchw.shape
    x = jnp.transpose(x_nchw, (0, 2, 3, 1))                       # NHWC
    x = jnp.pad(x, ((0, 0), (1, 1), (1, 1), (0, 0)))
    shifts = [x[:, i:i + h, j:j + w, :] for i in range(3) for j in range(3)]
    patches = jnp.concatenate(shifts, axis=-1).reshape(b, h * w, 9 * c)
    hw_pad = _round_up(h * w, row_multiple)
    patches = jnp.pad(patches, ((0, 0), (0, hw_pad - h * w), (0, k_pad - 9 * c)))
    return patches.astype(jnp.bfloat16)
# TODO(synk): at real ResNet input sizes, build the patches implicitly inside
#             the kernel (halo-tiled DMA) to avoid the 9x im2col HBM blowup.


@functools.partial(jax.jit, static_argnames=("mode", "tile_rows"))
def encoder_cnn_forward(images, params, mode, tile_rows=None):
    """images: NCHW float32.  mode in {'side_by_side', 'depthwise'}."""
    conv_w = params["conv_w"].astype(jnp.bfloat16)        # [K_PAD, FEAT], pre-padded
    conv_b = params["conv_b"].reshape(1, -1)
    b = images.shape[0]
    hw = images.shape[2] * images.shape[3]
    if mode == "side_by_side":
        tr = _round_up(tile_rows, 8) if tile_rows else _choose_tile_rows(hw, b, 1)
        patches = _im2col_3x3(images, K_PAD, tr)
        return fused_encode_side_by_side(
            patches, conv_w, conv_b,
            params["lin_w"], params["lin_b"].reshape(1, -1),
            params["bn_gamma"].reshape(1, -1), params["bn_beta"].reshape(1, -1),
            hw=hw, tile_rows=tr)
    elif mode == "depthwise":
        feat = params["conv_w"].shape[1]
        tr = _round_up(tile_rows, 8) if tile_rows else _choose_tile_rows(hw, b, 2)
        patches_a = _im2col_3x3(images[:, :3], K_PAD, tr)
        patches_b = _im2col_3x3(images[:, 3:], K_PAD, tr)
        return fused_encode_depthwise(
            patches_a, patches_b, conv_w, conv_b,
            params["lin_cat_w"][:feat], params["lin_cat_w"][feat:],
            params["lin_cat_b"].reshape(1, -1),
            hw=hw, tile_rows=tr)
    else:
        raise ValueError(mode)


def init_params(key, cin=3, feat=128, embed=32):
    """Deterministic synthetic parameters.  nn.Linear weights stored transposed
    as [in, out]; conv weight stored in im2col layout, zero-padded to K_PAD."""
    ks = jax.random.split(key, 6)
    conv_w = (jax.random.normal(ks[0], (3, 3, cin, feat), jnp.float32)
              * (1.0 / jnp.sqrt(9.0 * cin))).reshape(9 * cin, feat)
    conv_w = jnp.pad(conv_w, ((0, K_PAD - 9 * cin), (0, 0)))
    conv_b = jax.random.normal(ks[1], (feat,), jnp.float32) * 0.01
    lin_w = jax.random.normal(ks[2], (feat, embed), jnp.float32) / jnp.sqrt(feat * 1.0)
    lin_b = jax.random.normal(ks[3], (embed,), jnp.float32) * 0.01
    lin_cat_w = jax.random.normal(ks[4], (2 * feat, embed), jnp.float32) / jnp.sqrt(2.0 * feat)
    lin_cat_b = jax.random.normal(ks[5], (embed,), jnp.float32) * 0.01
    return {
        "conv_w": conv_w, "conv_b": conv_b,
        "lin_w": lin_w, "lin_b": lin_b,
        "lin_cat_w": lin_cat_w, "lin_cat_b": lin_cat_b,
        "bn_gamma": jnp.ones((embed,), jnp.float32),
        "bn_beta": jnp.zeros((embed,), jnp.float32),
    }


def reference_forward(images, params, mode):
    """Pure-JAX reference (same bf16 rounding of conv GEMM inputs, f32 math)."""
    def backbone(imgs):
        p = _im2col_3x3(imgs, K_PAD, 1).astype(jnp.float32)
        w = params["conv_w"].astype(jnp.bfloat16).astype(jnp.float32)
        y = jnp.maximum(jnp.einsum("bik,kf->bif", p, w) + params["conv_b"], 0.0)
        return jnp.mean(y, axis=1)
    if mode == "side_by_side":
        y = backbone(images) @ params["lin_w"] + params["lin_b"]
        mu = jnp.mean(y, axis=0, keepdims=True)
        var = jnp.mean((y - mu) ** 2, axis=0, keepdims=True)
        return (params["bn_gamma"] * (y - mu) * jax.lax.rsqrt(var + BN_EPS)
                + params["bn_beta"])
    fa, fb = backbone(images[:, :3]), backbone(images[:, 3:])
    return jnp.concatenate([fa, fb], axis=1) @ params["lin_cat_w"] + params["lin_cat_b"]


if __name__ == "__main__":
    B, CIN, H, W = 2, 3, 16, 16
    FEAT, EMBED = 128, 32

    root = jax.random.PRNGKey(0)
    k_img, k_img6, k_par = jax.random.split(root, 3)
    params = init_params(k_par, cin=CIN, feat=FEAT, embed=EMBED)

    # side_by_side: 3-channel input -> backbone -> Linear -> BatchNorm1d
    images = jax.random.normal(k_img, (B, CIN, H, W), jnp.float32)
    ref_sbs = reference_forward(images, params, "side_by_side")

    out_sbs = jax.block_until_ready(
        encoder_cnn_forward(images, params, mode="side_by_side"))
    assert out_sbs.shape == (B, EMBED)
    assert jnp.allclose(out_sbs, ref_sbs, rtol=2e-2, atol=2e-2), "side_by_side mismatch"

    # Forced small ragged tile: grid=3 with a 64/96-valid last tile, exercising
    # the multi-step GAP accumulator and the padded-row masking path.
    out_sbs_tiled = jax.block_until_ready(
        encoder_cnn_forward(images, params, mode="side_by_side", tile_rows=96))
    assert jnp.allclose(out_sbs_tiled, ref_sbs, rtol=2e-2, atol=2e-2), \
        "side_by_side (ragged tiles) mismatch"

    # depthwise: 6-channel input -> split -> shared backbone -> concat Linear
    images6 = jax.random.normal(k_img6, (B, 2 * CIN, H, W), jnp.float32)
    ref_dw = reference_forward(images6, params, "depthwise")
    out_dw = jax.block_until_ready(
        encoder_cnn_forward(images6, params, mode="depthwise"))
    assert out_dw.shape == (B, EMBED)
    assert jnp.allclose(out_dw, ref_dw, rtol=2e-2, atol=2e-2), "depthwise mismatch"

    print("KERNEL_OK")
</pallas_src>

<mosaic_0001>
module attributes {stable_mosaic.version = 11 : i64} {
  func.func @_fused_sbs_kernel(%arg0: i32, %arg1: memref<2x256x32xbf16, #tpu.memory_space<vmem>>, %arg2: memref<32x128xbf16, #tpu.memory_space<vmem>>, %arg3: memref<1x128xf32, #tpu.memory_space<vmem>>, %arg4: memref<128x32xf32, #tpu.memory_space<vmem>>, %arg5: memref<1x32xf32, #tpu.memory_space<vmem>>, %arg6: memref<1x32xf32, #tpu.memory_space<vmem>>, %arg7: memref<1x32xf32, #tpu.memory_space<vmem>>, %arg8: memref<2x32xf32, #tpu.memory_space<vmem>>, %arg9: memref<2x128xf32, #tpu.memory_space<vmem>>) attributes {dimension_semantics = [#tpu.dimension_semantics<arbitrary>], iteration_bounds = array<i64: 1>, scalar_prefetch = 0 : i64, scratch_operands = 1 : i64, tpu.core_type = #tpu.core_type<tc>, window_params = [{transform_indices = @transform_0, window_bounds = array<i64: 2, 256, 32>}, {pipeline_mode = #tpu.pipeline_mode<synchronous>, transform_indices = @transform_1, window_bounds = array<i64: 32, 128>}, {pipeline_mode = #tpu.pipeline_mode<synchronous>, transform_indices = @transform_2, window_bounds = array<i64: 1, 128>}, {pipeline_mode = #tpu.pipeline_mode<synchronous>, transform_indices = @transform_3, window_bounds = array<i64: 128, 32>}, {pipeline_mode = #tpu.pipeline_mode<synchronous>, transform_indices = @transform_4, window_bounds = array<i64: 1, 32>}, {pipeline_mode = #tpu.pipeline_mode<synchronous>, transform_indices = @transform_5, window_bounds = array<i64: 1, 32>}, {pipeline_mode = #tpu.pipeline_mode<synchronous>, transform_indices = @transform_6, window_bounds = array<i64: 1, 32>}, {pipeline_mode = #tpu.pipeline_mode<synchronous>, transform_indices = @transform_7, window_bounds = array<i64: 2, 32>}]} {
    %c0_i32 = arith.constant 0 : i32
    %0 = arith.cmpi eq, %arg0, %c0_i32 : i32
    %1 = arith.extui %0 : i1 to i32
    %c0_i32_0 = arith.constant 0 : i32
    %2 = arith.cmpi ne, %1, %c0_i32_0 : i32
    scf.if %2 {
      %cst_17 = arith.constant 0.000000e+00 : f32
      %31 = vector.broadcast %cst_17 : f32 to vector<2x128xf32>
      %c0_18 = arith.constant 0 : index
      %c0_19 = arith.constant 0 : index
      %32 = vector.load %arg9[%c0_18, %c0_19] : memref<2x128xf32, #tpu.memory_space<vmem>>, vector<2x128xf32>
      tpu.vector_store %arg9[%c0_18, %c0_19], %31 {strides = array<i32>} : memref<2x128xf32, #tpu.memory_space<vmem>>, vector<2x128xf32>,
    } else {
    }
    %c0 = arith.constant 0 : index
    %c0_1 = arith.constant 0 : index
    %3 = vector.load %arg9[%c0, %c0_1] : memref<2x128xf32, #tpu.memory_space<vmem>>, vector<2x128xf32>
    %c0_2 = arith.constant 0 : index
    %c0_3 = arith.constant 0 : index
    %c0_4 = arith.constant 0 : index
    %4 = vector.load %arg1[%c0_2, %c0_3, %c0_4] : memref<2x256x32xbf16, #tpu.memory_space<vmem>>, vector<2x256x32xbf16>
    %c0_5 = arith.constant 0 : index
    %c0_6 = arith.constant 0 : index
    %5 = vector.load %arg2[%c0_5, %c0_6] : memref<32x128xbf16, #tpu.memory_space<vmem>>, vector<32x128xbf16>
    %c0_7 = arith.constant 0 : index
    %c0_8 = arith.constant 0 : index
    %6 = vector.load %arg3[%c0_7, %c0_8] : memref<1x128xf32, #tpu.memory_space<vmem>>, vector<1x128xf32>
    %c256_i32 = arith.constant 256 : i32
    %7 = arith.muli %arg0, %c256_i32 : i32
    %8 = vector.shape_cast %4 : vector<2x256x32xbf16> to vector<512x32xbf16>
    %cst = arith.constant dense<0.000000e+00> : vector<512x128xf32>
    %9 = tpu.matmul %8, %5, %cst {dimension_numbers = #tpu.dot_dimension_numbers<[1], [0], [0], [1], [0, 0, 1, 1], [], []>} : vector<512x32xbf16>, vector<32x128xbf16>, vector<512x128xf32> -> vector<512x128xf32>
    %10 = vector.broadcast %6 : vector<1x128xf32> to vector<512x128xf32>
    %11 = arith.addf %9, %10 : vector<512x128xf32>
    %cst_9 = arith.constant 0.000000e+00 : f32
    %12 = vector.broadcast %cst_9 : f32 to vector<512x128xf32>
    %13 = arith.maximumf %11, %12 : vector<512x128xf32>
    %14 = vector.shape_cast %13 : vector<512x128xf32> to vector<2x256x128xf32>
    %15 = tpu.iota {dimensions = array<i32: 0>} : vector<256x1xi32>
    %16 = vector.broadcast %7 : i32 to vector<256x1xi32>
    %17 = arith.addi %15, %16 : vector<256x1xi32>
    %c256_i32_10 = arith.constant 256 : i32
    %18 = vector.broadcast %c256_i32_10 : i32 to vector<256x1xi32>
    %19 = arith.cmpi slt, %17, %18 : vector<256x1xi32>
    %20 = vector.shape_cast %19 : vector<256x1xi1> to vector<1x256x1xi1>
    %cst_11 = arith.constant 0.000000e+00 : f32
    %21 = vector.shape_cast %20 : vector<1x256x1xi1> to vector<1x256x1xi1>
    %22 = vector.broadcast %21 : vector<1x256x1xi1> to vector<2x256x128xi1>
    %23 = vector.broadcast %cst_11 : f32 to vector<2x256x128xf32>
    %24 = arith.select %22, %14, %23 : vector<2x256x128xi1>, vector<2x256x128xf32>
    %cst_12 = arith.constant dense<0.000000e+00> : vector<2x128xf32>
    %25 = vector.multi_reduction <add>, %24, %cst_12 [1] : vector<2x256x128xf32> to vector<2x128xf32>
    %26 = arith.addf %3, %25 : vector<2x128xf32>
    %c0_13 = arith.constant 0 : index
    %c0_14 = arith.constant 0 : index
    %27 = vector.load %arg9[%c0_13, %c0_14] : memref<2x128xf32, #tpu.memory_space<vmem>>, vector<2x128xf32>
    tpu.vector_store %arg9[%c0_13, %c0_14], %26 {strides = array<i32>} : memref<2x128xf32, #tpu.memory_space<vmem>>, vector<2x128xf32>,
    %c0_i32_15 = arith.constant 0 : i32
    %28 = arith.cmpi eq, %arg0, %c0_i32_15 : i32
    %29 = arith.extui %28 : i1 to i32
    %c0_i32_16 = arith.constant 0 : i32
    %30 = arith.cmpi ne, %29, %c0_i32_16 : i32
    scf.if %30 {
      %c0_17 = arith.constant 0 : index
      %c0_18 = arith.constant 0 : index
      %31 = vector.load %arg9[%c0_17, %c0_18] : memref<2x128xf32, #tpu.memory_space<vmem>>, vector<2x128xf32>
      %cst_19 = arith.constant 3.906250e-03 : f32
      %32 = vector.broadcast %cst_19 : f32 to vector<2x128xf32>
      %33 = arith.mulf %31, %32 : vector<2x128xf32>
      %c0_20 = arith.constant 0 : index
      %c0_21 = arith.constant 0 : index
      %34 = vector.load %arg4[%c0_20, %c0_21] : memref<128x32xf32, #tpu.memory_space<vmem>>, vector<128x32xf32>
      %cst_22 = arith.constant dense<0.000000e+00> : vector<2x32xf32>
      %35 = tpu.matmul %33, %34, %cst_22 {dimension_numbers = #tpu.dot_dimension_numbers<[1], [0], [0], [1], [0, 0, 1, 1], [], []>} : vector<2x128xf32>, vector<128x32xf32>, vector<2x32xf32> -> vector<2x32xf32>
      %c0_23 = arith.constant 0 : index
      %c0_24 = arith.constant 0 : index
      %36 = vector.load %arg5[%c0_23, %c0_24] : memref<1x32xf32, #tpu.memory_space<vmem>>, vector<1x32xf32>
      %37 = vector.broadcast %36 : vector<1x32xf32> to vector<2x32xf32>
      %38 = arith.addf %35, %37 : vector<2x32xf32>
      %cst_25 = arith.constant dense<0.000000e+00> : vector<32xf32>
      %39 = vector.multi_reduction <add>, %38, %cst_25 [0] : vector<2x32xf32> to vector<32xf32>
      %40 = vector.shape_cast %39 : vector<32xf32> to vector<1x32xf32>
      %cst_26 = arith.constant 2.000000e+00 : f32
      %41 = vector.broadcast %cst_26 : f32 to vector<1x32xf32>
      %42 = arith.divf %40, %41 : vector<1x32xf32>
      %43 = vector.broadcast %42 : vector<1x32xf32> to vector<2x32xf32>
      %44 = arith.subf %38, %43 : vector<2x32xf32>
      %45 = arith.mulf %44, %44 : vector<2x32xf32>
      %cst_27 = arith.constant dense<0.000000e+00> : vector<32xf32>
      %46 = vector.multi_reduction <add>, %45, %cst_27 [0] : vector<2x32xf32> to vector<32xf32>
      %47 = vector.shape_cast %46 : vector<32xf32> to vector<1x32xf32>
      %cst_28 = arith.constant 2.000000e+00 : f32
      %48 = vector.broadcast %cst_28 : f32 to vector<1x32xf32>
      %49 = arith.divf %47, %48 : vector<1x32xf32>
      %c0_29 = arith.constant 0 : index
      %c0_30 = arith.constant 0 : index
      %50 = vector.load %arg6[%c0_29, %c0_30] : memref<1x32xf32, #tpu.memory_space<vmem>>, vector<1x32xf32>
      %51 = vector.broadcast %42 : vector<1x32xf32> to vector<2x32xf32>
      %52 = arith.subf %38, %51 : vector<2x32xf32>
      %53 = vector.broadcast %50 : vector<1x32xf32> to vector<2x32xf32>
      %54 = arith.mulf %53, %52 : vector<2x32xf32>
      %cst_31 = arith.constant 9.99999974E-6 : f32
      %55 = vector.broadcast %cst_31 : f32 to vector<1x32xf32>
      %56 = arith.addf %49, %55 : vector<1x32xf32>
      %57 = math.rsqrt %56 : vector<1x32xf32>
      %58 = vector.broadcast %57 : vector<1x32xf32> to vector<2x32xf32>
      %59 = arith.mulf %54, %58 : vector<2x32xf32>
      %c0_32 = arith.constant 0 : index
      %c0_33 = arith.constant 0 : index
      %60 = vector.load %arg7[%c0_32, %c0_33] : memref<1x32xf32, #tpu.memory_space<vmem>>, vector<1x32xf32>
      %61 = vector.broadcast %60 : vector<1x32xf32> to vector<2x32xf32>
      %62 = arith.addf %59, %61 : vector<2x32xf32>
      %c0_34 = arith.constant 0 : index
      %c0_35 = arith.constant 0 : index
      %63 = vector.load %arg8[%c0_34, %c0_35] : memref<2x32xf32, #tpu.memory_space<vmem>>, vector<2x32xf32>
      tpu.vector_store %arg8[%c0_34, %c0_35], %62 {strides = array<i32>} : memref<2x32xf32, #tpu.memory_space<vmem>>, vector<2x32xf32>,
    } else {
    }
    return
  }
  func.func @transform_0(%arg0: i32) -> (i32, i32, i32) {
    %c0_i32 = arith.constant 0 : i32
    %c0_i32_0 = arith.constant 0 : i32
    %c0_i32_1 = arith.constant 0 : i32
    return %c0_i32, %arg0, %c0_i32_0 : i32, i32, i32
  }
  func.func @transform_1(%arg0: i32) -> (i32, i32) {
    %c0_i32 = arith.constant 0 : i32
    %c0_i32_0 = arith.constant 0 : i32
    %c0_i32_1 = arith.constant 0 : i32
    return %c0_i32, %c0_i32_0 : i32, i32
  }
  func.func @transform_2(%arg0: i32) -> (i32, i32) {
    %c0_i32 = arith.constant 0 : i32
    %c0_i32_0 = arith.constant 0 : i32
    %c0_i32_1 = arith.constant 0 : i32
    return %c0_i32, %c0_i32_0 : i32, i32
  }
  func.func @transform_3(%arg0: i32) -> (i32, i32) {
    %c0_i32 = arith.constant 0 : i32
    %c0_i32_0 = arith.constant 0 : i32
    %c0_i32_1 = arith.constant 0 : i32
    return %c0_i32, %c0_i32_0 : i32, i32
  }
  func.func @transform_4(%arg0: i32) -> (i32, i32) {
    %c0_i32 = arith.constant 0 : i32
    %c0_i32_0 = arith.constant 0 : i32
    %c0_i32_1 = arith.constant 0 : i32
    return %c0_i32, %c0_i32_0 : i32, i32
  }
  func.func @transform_5(%arg0: i32) -> (i32, i32) {
    %c0_i32 = arith.constant 0 : i32
    %c0_i32_0 = arith.constant 0 : i32
    %c0_i32_1 = arith.constant 0 : i32
    return %c0_i32, %c0_i32_0 : i32, i32
  }
  func.func @transform_6(%arg0: i32) -> (i32, i32) {
    %c0_i32 = arith.constant 0 : i32
    %c0_i32_0 = arith.constant 0 : i32
    %c0_i32_1 = arith.constant 0 : i32
    return %c0_i32, %c0_i32_0 : i32, i32
  }
  func.func @transform_7(%arg0: i32) -> (i32, i32) {
    %c0_i32 = arith.constant 0 : i32
    %c0_i32_0 = arith.constant 0 : i32
    %c0_i32_1 = arith.constant 0 : i32
    return %c0_i32, %c0_i32_0 : i32, i32
  }
}

</mosaic_0001>

<llo_original>
// kernel: encoder_cnn_forward.1
$region0: #{encoder_cnn_forward.1}
  #allocation0 [shape = 'u32[]', space=smem, size = 0x4, offset = 0x4, fixed_abs, tag = 'smem constant byte address 0x4 - core index']
  #allocation1 [shape = 'u32[144,128]{1,0:T(1,128)}', space=vmem, size = 0x12000, scoped, tag = 'internal scratch']
  #allocation2 [shape = 'f32[2,128]{1,0:T(2,128)}', space=vmem, size = 0x400, scoped, tag = 'scratch operand']
  %s0 = inlined_call_operand.vmem [shape: bf16[2,256,32], index: 0, kind: input, shape index: {}]
  %s1 = inlined_call_operand.vmem [shape: bf16[32,128], index: 1, kind: input, shape index: {}]
  %s2 = inlined_call_operand.vmem [shape: f32[1,128], index: 2, kind: input, shape index: {}]
  %s3 = inlined_call_operand.vmem [shape: f32[128,32], index: 3, kind: input, shape index: {}]
  %s4 = inlined_call_operand.vmem [shape: f32[1,32], index: 4, kind: input, shape index: {}]
  %s5 = inlined_call_operand.vmem [shape: f32[1,32], index: 5, kind: input, shape index: {}]
  %s6 = inlined_call_operand.vmem [shape: f32[1,32], index: 6, kind: input, shape index: {}]
  %s7 = inlined_call_operand.hbm [shape: f32[2,32], index: 7, kind: output, shape index: {}]
  %s8 = sld [smem:[#allocation0]]
  $region46: #{encoder_cnn_forward.1} parent=0
    _
  %s10 = ssub.s32 1, %s8
  %s11 = scalar_select 0, %s10, %s8
  $region1: #{encoder_cnn_forward.1} parent=0
    #allocation3 [shape = 'u8[1024]{0}', space=vmem, size = 0x400, scoped, tag = 'output window, operand 0, single buffered']
    #allocation4 [shape = 's32[1]{0}', space=sflag, size = 0x4, scoped, tag = 'scoped memory for encoder_cnn_forward.1']
    %12 = vsyncpa [#allocation4], 0
    // Predicated region
    $region2: #{encoder_cnn_forward.1} parent=1 // pred_check
      _
    $region3: #{encoder_cnn_forward.1} parent=1 // pred_check_branch
      %14 = sbr.rel (0) target = $region5
    $region4: #{encoder_cnn_forward.1} parent=1 // pred_region
      _
    $region5: #{encoder_cnn_forward.1} parent=1 // pred_fallthru
      _
    // Predicated region
    $region6: #{encoder_cnn_forward.1} parent=1 // pred_check
      _
    $region7: #{encoder_cnn_forward.1} parent=1 // pred_check_branch
      %16 = sbr.rel (0) target = $region9
    $region8: #{encoder_cnn_forward.1} parent=1 // pred_region
      _
    $region9: #{encoder_cnn_forward.1} parent=1 // pred_fallthru
      _
    // Predicated region
    $region10: #{encoder_cnn_forward.1} parent=1 // pred_check
      _
    $region11: #{encoder_cnn_forward.1} parent=1 // pred_check_branch
      %18 = sbr.rel (0) target = $region13
    $region12: #{encoder_cnn_forward.1} parent=1 // pred_region
      _
    $region13: #{encoder_cnn_forward.1} parent=1 // pred_fallthru
      _
    // Predicated region
    $region14: #{encoder_cnn_forward.1} parent=1 // pred_check
      _
    $region15: #{encoder_cnn_forward.1} parent=1 // pred_check_branch
      %20 = sbr.rel (0) target = $region17
    $region16: #{encoder_cnn_forward.1} parent=1 // pred_region
      _
    $region17: #{encoder_cnn_forward.1} parent=1 // pred_fallthru
      _
    // Predicated region
    $region18: #{encoder_cnn_forward.1} parent=1 // pred_check
      _
    $region19: #{encoder_cnn_forward.1} parent=1 // pred_check_branch
      %22 = sbr.rel (0) target = $region21
    $region20: #{encoder_cnn_forward.1} parent=1 // pred_region
      _
    $region21: #{encoder_cnn_forward.1} parent=1 // pred_fallthru
      _
    // Predicated region
    $region22: #{encoder_cnn_forward.1} parent=1 // pred_check
      _
    $region23: #{encoder_cnn_forward.1} parent=1 // pred_check_branch
      %24 = sbr.rel (0) target = $region25
    $region24: #{encoder_cnn_forward.1} parent=1 // pred_region
      _
    $region25: #{encoder_cnn_forward.1} parent=1 // pred_fallthru
      _
    // Predicated region
    $region26: #{encoder_cnn_forward.1} parent=1 // pred_check
      _
    $region27: #{encoder_cnn_forward.1} parent=1 // pred_check_branch
      %26 = sbr.rel (0) target = $region29
    $region28: #{encoder_cnn_forward.1} parent=1 // pred_region
      _
    $region29: #{encoder_cnn_forward.1} parent=1 // pred_fallthru
      _
    %p28 = scmp.eq.s32.totalorder 0, 0
    // Predicated region
    $region30: #{encoder_cnn_forward.1} parent=1 // pred_check
      %p29 = pneg %p28
    $region31: #{encoder_cnn_forward.1} parent=1 // pred_check_branch
      %31 = sbr.rel (%p29) target = $region33
    $region32: #{encoder_cnn_forward.1} parent=1 // pred_region
      %32 = vst [vmem:[#allocation2] sm:$0x3] 0.0
    $region33: #{encoder_cnn_forward.1} parent=1 // pred_fallthru
      _
    %v33 = vld [vmem:[#allocation2] sm:$0x3]
    %v34 = vld [vmem:[%s0] sm:$0xf]
    %v35 = vld [vmem:[%s0 + $0x4] sm:$0xf]
    %v36 = vld [vmem:[%s0 + $0x8] sm:$0xf]
    %v37 = vld [vmem:[%s0 + $0xc] sm:$0xf]
    %v38 = vld [vmem:[%s0 + $0x10] sm:$0xf]
    %v39 = vld [vmem:[%s0 + $0x14] sm:$0xf]
    %v40 = vld [vmem:[%s0 + $0x18] sm:$0xf]
    %v41 = vld [vmem:[%s0 + $0x1c] sm:$0xf]
    %v42 = vld [vmem:[%s0 + $0x20] sm:$0xf]
    %v43 = vld [vmem:[%s0 + $0x24] sm:$0xf]
    %v44 = vld [vmem:[%s0 + $0x28] sm:$0xf]
    %v45 = vld [vmem:[%s0 + $0x2c] sm:$0xf]
    %v46 = vld [vmem:[%s0 + $0x30] sm:$0xf]
    %v47 = vld [vmem:[%s0 + $0x34] sm:$0xf]
    %v48 = vld [vmem:[%s0 + $0x38] sm:$0xf]
    %v49 = vld [vmem:[%s0 + $0x3c] sm:$0xf]
    %v50 = vld [vmem:[%s0 + $0x40] sm:$0xf]
    %v51 = vld [vmem:[%s0 + $0x44] sm:$0xf]
    %v52 = vld [vmem:[%s0 + $0x48] sm:$0xf]
    %v53 = vld [vmem:[%s0 + $0x4c] sm:$0xf]
    %v54 = vld [vmem:[%s0 + $0x50] sm:$0xf]
    %v55 = vld [vmem:[%s0 + $0x54] sm:$0xf]
    %v56 = vld [vmem:[%s0 + $0x58] sm:$0xf]
    %v57 = vld [vmem:[%s0 + $0x5c] sm:$0xf]
    %v58 = vld [vmem:[%s0 + $0x60] sm:$0xf]
    %v59 = vld [vmem:[%s0 + $0x64] sm:$0xf]
    %v60 = vld [vmem:[%s0 + $0x68] sm:$0xf]
    %v61 = vld [vmem:[%s0 + $0x6c] sm:$0xf]
    %v62 = vld [vmem:[%s0 + $0x70] sm:$0xf]
    %v63 = vld [vmem:[%s0 + $0x74] sm:$0xf]
    %v64 = vld [vmem:[%s0 + $0x78] sm:$0xf]
    %v65 = vld [vmem:[%s0 + $0x7c] sm:$0xf]
    %v66 = vld [vmem:[%s0 + $0x80] sm:$0xf]
    %v67 = vld [vmem:[%s0 + $0x84] sm:$0xf]
    %v68 = vld [vmem:[%s0 + $0x88] sm:$0xf]
    %v69 = vld [vmem:[%s0 + $0x8c] sm:$0xf]
    %v70 = vld [vmem:[%s0 + $0x90] sm:$0xf]
    %v71 = vld [vmem:[%s0 + $0x94] sm:$0xf]
    %v72 = vld [vmem:[%s0 + $0x98] sm:$0xf]
    %v73 = vld [vmem:[%s0 + $0x9c] sm:$0xf]
    %v74 = vld [vmem:[%s0 + $0xa0] sm:$0xf]
    %v75 = vld [vmem:[%s0 + $0xa4] sm:$0xf]
    %v76 = vld [vmem:[%s0 + $0xa8] sm:$0xf]
    %v77 = vld [vmem:[%s0 + $0xac] sm:$0xf]
    %v78 = vld [vmem:[%s0 + $0xb0] sm:$0xf]
    %v79 = vld [vmem:[%s0 + $0xb4] sm:$0xf]
    %v80 = vld [vmem:[%s0 + $0xb8] sm:$0xf]
    %v81 = vld [vmem:[%s0 + $0xbc] sm:$0xf]
    %v82 = vld [vmem:[%s0 + $0xc0] sm:$0xf]
    %v83 = vld [vmem:[%s0 + $0xc4] sm:$0xf]
    %v84 = vld [vmem:[%s0 + $0xc8] sm:$0xf]
    %v85 = vld [vmem:[%s0 + $0xcc] sm:$0xf]
    %v86 = vld [vmem:[%s0 + $0xd0] sm:$0xf]
    %v87 = vld [vmem:[%s0 + $0xd4] sm:$0xf]
    %v88 = vld [vmem:[%s0 + $0xd8] sm:$0xf]
    %v89 = vld [vmem:[%s0 + $0xdc] sm:$0xf]
    %v90 = vld [vmem:[%s0 + $0xe0] sm:$0xf]
    %v91 = vld [vmem:[%s0 + $0xe4] sm:$0xf]
    %v92 = vld [vmem:[%s0 + $0xe8] sm:$0xf]
    %v93 = vld [vmem:[%s0 + $0xec] sm:$0xf]
    %v94 = vld [vmem:[%s0 + $0xf0] sm:$0xf]
    %v95 = vld [vmem:[%s0 + $0xf4] sm:$0xf]
    %v96 = vld [vmem:[%s0 + $0xf8] sm:$0xf]
    %v97 = vld [vmem:[%s0 + $0xfc] sm:$0xf]
    %v98 = vld [vmem:[%s1] sm:$0xf]
    %v99 = vld [vmem:[%s1 + $0x4] sm:$0xf]
    %v100 = vld [vmem:[%s1 + $0x8] sm:$0xf]
    %v101 = vld [vmem:[%s1 + $0xc] sm:$0xf]
    %v102 = vld [vmem:[%s2] sm:$0x1]
    %s103 = smul.u32 0, 256
    %v105 = vlaneseq
    %v106 = vshrl.u32 %v105, 7
    %v107 = vsub.s32 0, %v106
    %v108 = vrot.slane %v102, %v107
    %v174 = vunpack.c.l.b16 %v34
    %v175 = vunpack.c.l.b16 %v35
    %v176 = vunpack.c.l.b16 %v36
    %v177 = vunpack.c.l.b16 %v37
    %v178 = vunpack.c.l.b16 %v38
    %v179 = vunpack.c.l.b16 %v39
    %v180 = vunpack.c.l.b16 %v40
    %v181 = vunpack.c.l.b16 %v41
    %v182 = vunpack.c.l.b16 %v42
    %v183 = vunpack.c.l.b16 %v43
    %v184 = vunpack.c.l.b16 %v44
    %v185 = vunpack.c.l.b16 %v45
    %v186 = vunpack.c.l.b16 %v46
    %v187 = vunpack.c.l.b16 %v47
    %v188 = vunpack.c.l.b16 %v48
    %v189 = vunpack.c.l.b16 %v49
    %v190 = vunpack.c.l.b16 %v50
    %v191 = vunpack.c.l.b16 %v51
    %v192 = vunpack.c.l.b16 %v52
    %v193 = vunpack.c.l.b16 %v53
    %v194 = vunpack.c.l.b16 %v54
    %v195 = vunpack.c.l.b16 %v55
    %v196 = vunpack.c.l.b16 %v56
    %v197 = vunpack.c.l.b16 %v57
    %v198 = vunpack.c.l.b16 %v58
    %v199 = vunpack.c.l.b16 %v59
    %v200 = vunpack.c.l.b16 %v60
    %v201 = vunpack.c.l.b16 %v61
    %v202 = vunpack.c.l.b16 %v62
    %v203 = vunpack.c.l.b16 %v63
    %v204 = vunpack.c.l.b16 %v64
    %v205 = vunpack.c.l.b16 %v65
    %v206 = vunpack.c.l.b16 %v66
    %v207 = vunpack.c.l.b16 %v67
    %v208 = vunpack.c.l.b16 %v68
    %v209 = vunpack.c.l.b16 %v69
    %v210 = vunpack.c.l.b16 %v70
    %v211 = vunpack.c.l.b16 %v71
    %v212 = vunpack.c.l.b16 %v72
    %v213 = vunpack.c.l.b16 %v73
    %v214 = vunpack.c.l.b16 %v74
    %v215 = vunpack.c.l.b16 %v75
    %v216 = vunpack.c.l.b16 %v76
    %v217 = vunpack.c.l.b16 %v77
    %v218 = vunpack.c.l.b16 %v78
    %v219 = vunpack.c.l.b16 %v79
    %v220 = vunpack.c.l.b16 %v80
    %v221 = vunpack.c.l.b16 %v81
    %v222 = vunpack.c.l.b16 %v82
    %v223 = vunpack.c.l.b16 %v83
    %v224 = vunpack.c.l.b16 %v84
    %v225 = vunpack.c.l.b16 %v85
    %v226 = vunpack.c.l.b16 %v86
    %v227 = vunpack.c.l.b16 %v87
    %v228 = vunpack.c.l.b16 %v88
    %v229 = vunpack.c.l.b16 %v89
    %v230 = vunpack.c.l.b16 %v90
    %v231 = vunpack.c.l.b16 %v91
    %v232 = vunpack.c.l.b16 %v92
    %v233 = vunpack.c.l.b16 %v93
    %v234 = vunpack.c.l.b16 %v94
    %v235 = vunpack.c.l.b16 %v95
    %v236 = vunpack.c.l.b16 %v96
    %v237 = vunpack.c.l.b16 %v97
    %v238 = vpack.c.b16 %v175, %v174
    %v239 = vpack.c.b16 %v177, %v176
    %v240 = vpack.c.b16 %v179, %v178
    %v241 = vpack.c.b16 %v181, %v180
    %v242 = vpack.c.b16 %v183, %v182
    %v243 = vpack.c.b16 %v185, %v184
    %v244 = vpack.c.b16 %v187, %v186
    %v245 = vpack.c.b16 %v189, %v188
    %v246 = vpack.c.b16 %v191, %v190
    %v247 = vpack.c.b16 %v193, %v192
    %v248 = vpack.c.b16 %v195, %v194
    %v249 = vpack.c.b16 %v197, %v196
    %v250 = vpack.c.b16 %v199, %v198
    %v251 = vpack.c.b16 %v201, %v200
    %v252 = vpack.c.b16 %v203, %v202
    %v253 = vpack.c.b16 %v205, %v204
    %v254 = vpack.c.b16 %v207, %v206
    %v255 = vpack.c.b16 %v209, %v208
    %v256 = vpack.c.b16 %v211, %v210
    %v257 = vpack.c.b16 %v213, %v212
    %v258 = vpack.c.b16 %v215, %v214
    %v259 = vpack.c.b16 %v217, %v216
    %v260 = vpack.c.b16 %v219, %v218
    %v261 = vpack.c.b16 %v221, %v220
    %v262 = vpack.c.b16 %v223, %v222
    %v263 = vpack.c.b16 %v225, %v224
    %v264 = vpack.c.b16 %v227, %v226
    %v265 = vpack.c.b16 %v229, %v228
    %v266 = vpack.c.b16 %v231, %v230
    %v267 = vpack.c.b16 %v233, %v232
    %v268 = vpack.c.b16 %v235, %v234
    %v269 = vpack.c.b16 %v237, %v236
    %v274 = vunpack.c.l.b16 %v98
    %v275 = vunpack.c.l.b16 %v99
    %v276 = vunpack.c.l.b16 %v100
    %v277 = vunpack.c.l.b16 %v101
    %v278 = vpack.c.b16 %v275, %v274
    %v279 = vpack.c.b16 %v277, %v276
    %vm282 = vcmask 261120
    %v284 = vsel %vm282, %v238, 0
    %v287 = vsel %vm282, %v239, 0
    %v290 = vsel %vm282, %v240, 0
    %v293 = vsel %vm282, %v241, 0
    %v296 = vsel %vm282, %v242, 0
    %v299 = vsel %vm282, %v243, 0
    %v302 = vsel %vm282, %v244, 0
    %v305 = vsel %vm282, %v245, 0
    %v308 = vsel %vm282, %v246, 0
    %v311 = vsel %vm282, %v247, 0
    %v314 = vsel %vm282, %v248, 0
    %v317 = vsel %vm282, %v249, 0
    %v320 = vsel %vm282, %v250, 0
    %v323 = vsel %vm282, %v251, 0
    %v326 = vsel %vm282, %v252, 0
    %v329 = vsel %vm282, %v253, 0
    %v332 = vsel %vm282, %v254, 0
    %v335 = vsel %vm282, %v255, 0
    %v338 = vsel %vm282, %v256, 0
    %v341 = vsel %vm282, %v257, 0
    %v344 = vsel %vm282, %v258, 0
    %v347 = vsel %vm282, %v259, 0
    %v350 = vsel %vm282, %v260, 0
    %v353 = vsel %vm282, %v261, 0
    %v356 = vsel %vm282, %v262, 0
    %v359 = vsel %vm282, %v263, 0
    %v362 = vsel %vm282, %v264, 0
    %v365 = vsel %vm282, %v265, 0
    %v368 = vsel %vm282, %v266, 0
    %v371 = vsel %vm282, %v267, 0
    %v374 = vsel %vm282, %v268, 0
    %v377 = vsel %vm282, %v269, 0
    %379 = vmatprep.subr.bf16.mxu0 0
    %380 = vmatpush1.bf16.msra.mxu0 %v278
    %381 = vmatprep.subr.bf16.mxu0 0
    %382 = vmatpush1.bf16.msra.mxu0 %v279
    %383 = vmatprep.subr.bf16.mxu0 0
    %384 = vmatpush1.bf16.msra.mxu0 0
    %385 = vmatprep.subr.bf16.mxu0 0
    %386 = vmatpush1.bf16.msra.mxu0 0
    %387 = vmatprep.subr.bf16.mxu0 0
    %388 = vmatpush1.bf16.msra.mxu0 0
    %389 = vmatprep.subr.bf16.mxu0 0
    %390 = vmatpush1.bf16.msra.mxu0 0
    %391 = vmatprep.subr.bf16.mxu0 0
    %392 = vmatpush1.bf16.msra.mxu0 0
    %393 = vmatprep.subr.bf16.mxu0 0
    %394 = vmatpush1.bf16.msra.mxu0 0
    %395 = vmatprep.subr.bf16.mxu0 0
    %396 = vmatpush1.bf16.msra.mxu0 0
    %397 = vmatprep.subr.bf16.mxu0 0
    %398 = vmatpush1.bf16.msra.mxu0 0
    %399 = vmatprep.subr.bf16.mxu0 0
    %400 = vmatpush1.bf16.msra.mxu0 0
    %401 = vmatprep.subr.bf16.mxu0 0
    %402 = vmatpush1.bf16.msra.mxu0 0
    %403 = vmatprep.subr.bf16.mxu0 0
    %404 = vmatpush1.bf16.msra.mxu0 0
    %405 = vmatprep.subr.bf16.mxu0 0
    %406 = vmatpush1.bf16.msra.mxu0 0
    %407 = vmatprep.subr.bf16.mxu0 0
    %408 = vmatpush1.bf16.msra.mxu0 0
    %409 = vmatprep.subr.bf16.mxu0 0
    %410 = vmatpush1.bf16.msra.mxu0 0
    %411 = vmatprep.mubr.bf16.mxu0 0
    %412 = vmatmul.mubr.bf16.gmra.mrb[0].mxu0 %v284
    %v413 = vpop.f32.mrb[0].mxu0
    %v414 = vadd.f32 %v108, %v413
    %v415 = vpop.f32.mrb[0].mxu0
    %v416 = vpop.f32.mrb[0].mxu0
    %v417 = vadd.f32 %v108, %v416
    %v418 = vpop.f32.mrb[0].mxu0
    %419 = vmatprep.mubr.bf16.mxu0 0
    %420 = vmatmul.mubr.bf16.gmra.mrb[0].mxu0 %v287
    %v421 = vpop.f32.mrb[0].mxu0
    %v422 = vadd.f32 %v108, %v421
    %v423 = vpop.f32.mrb[0].mxu0
    %v424 = vpop.f32.mrb[0].mxu0
    %v425 = vadd.f32 %v108, %v424
    %v426 = vpop.f32.mrb[0].mxu0
    %427 = vmatprep.mubr.bf16.mxu0 0
    %428 = vmatmul.mubr.bf16.gmra.mrb[0].mxu0 %v290
    %v429 = vpop.f32.mrb[0].mxu0
    %v430 = vadd.f32 %v108, %v429
    %v431 = vpop.f32.mrb[0].mxu0
    %v432 = vpop.f32.mrb[0].mxu0
    %v433 = vadd.f32 %v108, %v432
    %v434 = vpop.f32.mrb[0].mxu0
    %435 = vmatprep.mubr.bf16.mxu0 0
    %436 = vmatmul.mubr.bf16.gmra.mrb[0].mxu0 %v293
    %v437 = vpop.f32.mrb[0].mxu0
    %v438 = vadd.f32 %v108, %v437
    %v439 = vpop.f32.mrb[0].mxu0
    %v440 = vpop.f32.mrb[0].mxu0
    %v441 = vadd.f32 %v108, %v440
    %v442 = vpop.f32.mrb[0].mxu0
    %443 = vmatprep.mubr.bf16.mxu0 0
    %444 = vmatmul.mubr.bf16.gmra.mrb[0].mxu0 %v296
    %v445 = vpop.f32.mrb[0].mxu0
    %v446 = vadd.f32 %v108, %v445
    %v447 = vpop.f32.mrb[0].mxu0
    %v448 = vpop.f32.mrb[0].mxu0
    %v449 = vadd.f32 %v108, %v448
    %v450 = vpop.f32.mrb[0].mxu0
    %451 = vmatprep.mubr.bf16.mxu0 0
    %452 = vmatmul.mubr.bf16.gmra.mrb[0].mxu0 %v299
    %v453 = vpop.f32.mrb[0].mxu0
    %v454 = vadd.f32 %v108, %v453
    %v455 = vpop.f32.mrb[0].mxu0
    %v456 = vpop.f32.mrb[0].mxu0
    %v457 = vadd.f32 %v108, %v456
    %v458 = vpop.f32.mrb[0].mxu0
    %459 = vmatprep.mubr.bf16.mxu0 0
    %460 = vmatmul.mubr.bf16.gmra.mrb[0].mxu0 %v302
    %v461 = vpop.f32.mrb[0].mxu0
    %v462 = vadd.f32 %v108, %v461
    %v463 = vpop.f32.mrb[0].mxu0
    %v464 = vpop.f32.mrb[0].mxu0
    %v465 = vadd.f32 %v108, %v464
    %v466 = vpop.f32.mrb[0].mxu0
    %467 = vmatprep.mubr.bf16.mxu0 0
    %468 = vmatmul.mubr.bf16.gmra.mrb[0].mxu0 %v305
    %v469 = vpop.f32.mrb[0].mxu0
    %v470 = vadd.f32 %v108, %v469
    %v471 = vpop.f32.mrb[0].mxu0
    %v472 = vpop.f32.mrb[0].mxu0
    %v473 = vadd.f32 %v108, %v472
    %v474 = vpop.f32.mrb[0].mxu0
    %475 = vmatprep.mubr.bf16.mxu0 0
    %476 = vmatmul.mubr.bf16.gmra.mrb[0].mxu0 %v308
    %v477 = vpop.f32.mrb[0].mxu0
    %v478 = vadd.f32 %v108, %v477
    %v479 = vpop.f32.mrb[0].mxu0
    %v480 = vpop.f32.mrb[0].mxu0
    %v481 = vadd.f32 %v108, %v480
    %v482 = vpop.f32.mrb[0].mxu0
    %483 = vmatprep.mubr.bf16.mxu0 0
    %484 = vmatmul.mubr.bf16.gmra.mrb[0].mxu0 %v311
    %v485 = vpop.f32.mrb[0].mxu0
    %v486 = vadd.f32 %v108, %v485
    %v487 = vpop.f32.mrb[0].mxu0
    %v488 = vpop.f32.mrb[0].mxu0
    %v489 = vadd.f32 %v108, %v488
    %v490 = vpop.f32.mrb[0].mxu0
    %491 = vmatprep.mubr.bf16.mxu0 0
    %492 = vmatmul.mubr.bf16.gmra.mrb[0].mxu0 %v314
    %v493 = vpop.f32.mrb[0].mxu0
    %v494 = vadd.f32 %v108, %v493
    %v495 = vpop.f32.mrb[0].mxu0
    %v496 = vpop.f32.mrb[0].mxu0
    %v497 = vadd.f32 %v108, %v496
    %v498 = vpop.f32.mrb[0].mxu0
    %499 = vmatprep.mubr.bf16.mxu0 0
    %500 = vmatmul.mubr.bf16.gmra.mrb[0].mxu0 %v317
    %v501 = vpop.f32.mrb[0].mxu0
    %v502 = vadd.f32 %v108, %v501
    %v503 = vpop.f32.mrb[0].mxu0
    %v504 = vpop.f32.mrb[0].mxu0
    %v505 = vadd.f32 %v108, %v504
    %v506 = vpop.f32.mrb[0].mxu0
    %507 = vmatprep.mubr.bf16.mxu0 0
    %508 = vmatmul.mubr.bf16.gmra.mrb[0].mxu0 %v320
    %v509 = vpop.f32.mrb[0].mxu0
    %v510 = vadd.f32 %v108, %v509
    %v511 = vpop.f32.mrb[0].mxu0
    %v512 = vpop.f32.mrb[0].mxu0
    %v513 = vadd.f32 %v108, %v512
    %v514 = vpop.f32.mrb[0].mxu0
    %515 = vmatprep.mubr.bf16.mxu0 0
    %516 = vmatmul.mubr.bf16.gmra.mrb[0].mxu0 %v323
    %v517 = vpop.f32.mrb[0].mxu0
    %v518 = vadd.f32 %v108, %v517
    %v519 = vpop.f32.mrb[0].mxu0
    %v520 = vpop.f32.mrb[0].mxu0
    %v521 = vadd.f32 %v108, %v520
    %v522 = vpop.f32.mrb[0].mxu0
    %523 = vmatprep.mubr.bf16.mxu0 0
    %524 = vmatmul.mubr.bf16.gmra.mrb[0].mxu0 %v326
    %v525 = vpop.f32.mrb[0].mxu0
    %v526 = vadd.f32 %v108, %v525
    %v527 = vpop.f32.mrb[0].mxu0
    %v528 = vpop.f32.mrb[0].mxu0
    %v529 = vadd.f32 %v108, %v528
    %v530 = vpop.f32.mrb[0].mxu0
    %531 = vmatprep.mubr.bf16.mxu0 0
    %532 = vmatmul.mubr.bf16.gmra.mrb[0].mxu0 %v329
    %v533 = vpop.f32.mrb[0].mxu0
    %v534 = vadd.f32 %v108, %v533
    %v535 = vpop.f32.mrb[0].mxu0
    %v536 = vpop.f32.mrb[0].mxu0
    %v537 = vadd.f32 %v108, %v536
    %v538 = vpop.f32.mrb[0].mxu0
    %539 = vmatprep.mubr.bf16.mxu0 0
    %540 = vmatmul.mubr.bf16.gmra.mrb[0].mxu0 %v332
    %v541 = vpop.f32.mrb[0].mxu0
    %v542 = vadd.f32 %v108, %v541
    %v543 = vpop.f32.mrb[0].mxu0
    %v544 = vpop.f32.mrb[0].mxu0
    %v545 = vadd.f32 %v108, %v544
    %v546 = vpop.f32.mrb[0].mxu0
    %547 = vmatprep.mubr.bf16.mxu0 0
    %548 = vmatmul.mubr.bf16.gmra.mrb[0].mxu0 %v335
    %v549 = vpop.f32.mrb[0].mxu0
    %v550 = vadd.f32 %v108, %v549
    %v551 = vpop.f32.mrb[0].mxu0
    %v552 = vpop.f32.mrb[0].mxu0
    %v553 = vadd.f32 %v108, %v552
    %v554 = vpop.f32.mrb[0].mxu0
    %555 = vmatprep.mubr.bf16.mxu0 0
    %556 = vmatmul.mubr.bf16.gmra.mrb[0].mxu0 %v338
    %v557 = vpop.f32.mrb[0].mxu0
    %v558 = vadd.f32 %v108, %v557
    %v559 = vpop.f32.mrb[0].mxu0
    %v560 = vpop.f32.mrb[0].mxu0
    %v561 = vadd.f32 %v108, %v560
    %v562 = vpop.f32.mrb[0].mxu0
    %563 = vmatprep.mubr.bf16.mxu0 0
    %564 = vmatmul.mubr.bf16.gmra.mrb[0].mxu0 %v341
    %v565 = vpop.f32.mrb[0].mxu0
    %v566 = vadd.f32 %v108, %v565
    %v567 = vpop.f32.mrb[0].mxu0
    %v568 = vpop.f32.mrb[0].mxu0
    %v569 = vadd.f32 %v108, %v568
    %v570 = vpop.f32.mrb[0].mxu0
    %571 = vmatprep.mubr.bf16.mxu0 0
    %572 = vmatmul.mubr.bf16.gmra.mrb[0].mxu0 %v344
    %v573 = vpop.f32.mrb[0].mxu0
    %v574 = vadd.f32 %v108, %v573
    %v575 = vpop.f32.mrb[0].mxu0
    %v576 = vpop.f32.mrb[0].mxu0
    %v577 = vadd.f32 %v108, %v576
    %v578 = vpop.f32.mrb[0].mxu0
    %579 = vmatprep.mubr.bf16.mxu0 0
    %580 = vmatmul.mubr.bf16.gmra.mrb[0].mxu0 %v347
    %v581 = vpop.f32.mrb[0].mxu0
    %v582 = vadd.f32 %v108, %v581
    %v583 = vpop.f32.mrb[0].mxu0
    %v584 = vpop.f32.mrb[0].mxu0
    %v585 = vadd.f32 %v108, %v584
    %v586 = vpop.f32.mrb[0].mxu0
    %587 = vmatprep.mubr.bf16.mxu0 0
    %588 = vmatmul.mubr.bf16.gmra.mrb[0].mxu0 %v350
    %v589 = vpop.f32.mrb[0].mxu0
    %v590 = vadd.f32 %v108, %v589
    %v591 = vpop.f32.mrb[0].mxu0
    %v592 = vpop.f32.mrb[0].mxu0
    %v593 = vadd.f32 %v108, %v592
    %v594 = vpop.f32.mrb[0].mxu0
    %595 = vmatprep.mubr.bf16.mxu0 0
    %596 = vmatmul.mubr.bf16.gmra.mrb[0].mxu0 %v353
    %v597 = vpop.f32.mrb[0].mxu0
    %v598 = vadd.f32 %v108, %v597
    %v599 = vpop.f32.mrb[0].mxu0
    %v600 = vpop.f32.mrb[0].mxu0
    %v601 = vadd.f32 %v108, %v600
    %v602 = vpop.f32.mrb[0].mxu0
    %603 = vmatprep.mubr.bf16.mxu0 0
    %604 = vmatmul.mubr.bf16.gmra.mrb[0].mxu0 %v356
    %v605 = vpop.f32.mrb[0].mxu0
    %v606 = vadd.f32 %v108, %v605
    %v607 = vpop.f32.mrb[0].mxu0
    %v608 = vpop.f32.mrb[0].mxu0
    %v609 = vadd.f32 %v108, %v608
    %v610 = vpop.f32.mrb[0].mxu0
    %611 = vmatprep.mubr.bf16.mxu0 0
    %612 = vmatmul.mubr.bf16.gmra.mrb[0].mxu0 %v359
    %v613 = vpop.f32.mrb[0].mxu0
    %v614 = vadd.f32 %v108, %v613
    %v615 = vpop.f32.mrb[0].mxu0
    %v616 = vpop.f32.mrb[0].mxu0
    %v617 = vadd.f32 %v108, %v616
    %v618 = vpop.f32.mrb[0].mxu0
    %619 = vmatprep.mubr.bf16.mxu0 0
    %620 = vmatmul.mubr.bf16.gmra.mrb[0].mxu0 %v362
    %v621 = vpop.f32.mrb[0].mxu0
    %v622 = vadd.f32 %v108, %v621
    %v623 = vpop.f32.mrb[0].mxu0
    %v624 = vpop.f32.mrb[0].mxu0
    %v625 = vadd.f32 %v108, %v624
    %v626 = vpop.f32.mrb[0].mxu0
    %627 = vmatprep.mubr.bf16.mxu0 0
    %628 = vmatmul.mubr.bf16.gmra.mrb[0].mxu0 %v365
    %v629 = vpop.f32.mrb[0].mxu0
    %v630 = vadd.f32 %v108, %v629
    %v631 = vpop.f32.mrb[0].mxu0
    %v632 = vpop.f32.mrb[0].mxu0
    %v633 = vadd.f32 %v108, %v632
    %v634 = vpop.f32.mrb[0].mxu0
    %635 = vmatprep.mubr.bf16.mxu0 0
    %636 = vmatmul.mubr.bf16.gmra.mrb[0].mxu0 %v368
    %v637 = vpop.f32.mrb[0].mxu0
    %v638 = vadd.f32 %v108, %v637
    %v639 = vpop.f32.mrb[0].mxu0
    %v640 = vpop.f32.mrb[0].mxu0
    %v641 = vadd.f32 %v108, %v640
    %v642 = vpop.f32.mrb[0].mxu0
    %643 = vmatprep.mubr.bf16.mxu0 0
    %644 = vmatmul.mubr.bf16.gmra.mrb[0].mxu0 %v371
    %v645 = vpop.f32.mrb[0].mxu0
    %v646 = vadd.f32 %v108, %v645
    %v647 = vpop.f32.mrb[0].mxu0
    %v648 = vpop.f32.mrb[0].mxu0
    %v649 = vadd.f32 %v108, %v648
    %v650 = vpop.f32.mrb[0].mxu0
    %651 = vmatprep.mubr.bf16.mxu0 0
    %652 = vmatmul.mubr.bf16.gmra.mrb[0].mxu0 %v374
    %v653 = vpop.f32.mrb[0].mxu0
    %v654 = vadd.f32 %v108, %v653
    %v655 = vpop.f32.mrb[0].mxu0
    %v656 = vpop.f32.mrb[0].mxu0
    %v657 = vadd.f32 %v108, %v656
    %v658 = vpop.f32.mrb[0].mxu0
    %659 = vmatprep.mubr.bf16.mxu0 0
    %660 = vmatmul.mubr.bf16.gmra.mrb[0].mxu0 %v377
    %v661 = vpop.f32.mrb[0].mxu0
    %v662 = vadd.f32 %v108, %v661
    %v663 = vpop.f32.mrb[0].mxu0
    %v664 = vpop.f32.mrb[0].mxu0
    %v665 = vadd.f32 %v108, %v664
    %v666 = vpop.f32.mrb[0].mxu0
    %667 = vdwg.mxu0
    %v668 = vmax.f32 %v414, 0.0
    %v669 = vmax.f32 %v417, 0.0
    %v670 = vmax.f32 %v422, 0.0
    %v671 = vmax.f32 %v425, 0.0
    %v672 = vmax.f32 %v430, 0.0
    %v673 = vmax.f32 %v433, 0.0
    %v674 = vmax.f32 %v438, 0.0
    %v675 = vmax.f32 %v441, 0.0
    %v676 = vmax.f32 %v446, 0.0
    %v677 = vmax.f32 %v449, 0.0
    %v678 = vmax.f32 %v454, 0.0
    %v679 = vmax.f32 %v457, 0.0
    %v680 = vmax.f32 %v462, 0.0
    %v681 = vmax.f32 %v465, 0.0
    %v682 = vmax.f32 %v470, 0.0
    %v683 = vmax.f32 %v473, 0.0
    %v684 = vmax.f32 %v478, 0.0
    %v685 = vmax.f32 %v481, 0.0
    %v686 = vmax.f32 %v486, 0.0
    %v687 = vmax.f32 %v489, 0.0
    %v688 = vmax.f32 %v494, 0.0
    %v689 = vmax.f32 %v497, 0.0
    %v690 = vmax.f32 %v502, 0.0
    %v691 = vmax.f32 %v505, 0.0
    %v692 = vmax.f32 %v510, 0.0
    %v693 = vmax.f32 %v513, 0.0
    %v694 = vmax.f32 %v518, 0.0
    %v695 = vmax.f32 %v521, 0.0
    %v696 = vmax.f32 %v526, 0.0
    %v697 = vmax.f32 %v529, 0.0
    %v698 = vmax.f32 %v534, 0.0
    %v699 = vmax.f32 %v537, 0.0
    %v700 = vmax.f32 %v542, 0.0
    %v701 = vmax.f32 %v545, 0.0
    %v702 = vmax.f32 %v550, 0.0
    %v703 = vmax.f32 %v553, 0.0
    %v704 = vmax.f32 %v558, 0.0
    %v705 = vmax.f32 %v561, 0.0
    %v706 = vmax.f32 %v566, 0.0
    %v707 = vmax.f32 %v569, 0.0
    %v708 = vmax.f32 %v574, 0.0
    %v709 = vmax.f32 %v577, 0.0
    %v710 = vmax.f32 %v582, 0.0
    %v711 = vmax.f32 %v585, 0.0
    %v712 = vmax.f32 %v590, 0.0
    %v713 = vmax.f32 %v593, 0.0
    %v714 = vmax.f32 %v598, 0.0
    %v715 = vmax.f32 %v601, 0.0
    %v716 = vmax.f32 %v606, 0.0
    %v717 = vmax.f32 %v609, 0.0
    %v718 = vmax.f32 %v614, 0.0
    %v719 = vmax.f32 %v617, 0.0
    %v720 = vmax.f32 %v622, 0.0
    %v721 = vmax.f32 %v625, 0.0
    %v722 = vmax.f32 %v630, 0.0
    %v723 = vmax.f32 %v633, 0.0
    %v724 = vmax.f32 %v638, 0.0
    %v725 = vmax.f32 %v641, 0.0
    %v726 = vmax.f32 %v646, 0.0
    %v727 = vmax.f32 %v649, 0.0
    %v728 = vmax.f32 %v654, 0.0
    %v729 = vmax.f32 %v657, 0.0
    %v730 = vmax.f32 %v662, 0.0
    %v731 = vmax.f32 %v665, 0.0
    %v732 = vlaneseq
    %v733 = vshrl.u32 %v732, 7
    %v734 = vadd.s32 %v733, 8
    %v735 = vadd.s32 %v733, 16
    %v736 = vadd.s32 %v733, 24
    %v737 = vadd.s32 %v733, 32
    %v738 = vadd.s32 %v733, 40
    %v739 = vadd.s32 %v733, 48
    %v740 = vadd.s32 %v733, 56
    %v741 = vadd.s32 %v733, 64
    %v742 = vadd.s32 %v733, 72
    %v743 = vadd.s32 %v733, 80
    %v744 = vadd.s32 %v733, 88
    %v745 = vadd.s32 %v733, 96
    %v746 = vadd.s32 %v733, 104
    %v747 = vadd.s32 %v733, 112
    %v748 = vadd.s32 %v733, 120
    %v749 = vadd.s32 %v733, 128
    %v750 = vadd.s32 %v733, 136
    %v751 = vadd.s32 %v733, 144
    %v752 = vadd.s32 %v733, 152
    %v753 = vadd.s32 %v733, 160
    %v754 = vadd.s32 %v733, 168
    %v755 = vadd.s32 %v733, 176
    %v756 = vadd.s32 %v733, 184
    %v757 = vadd.s32 %v733, 192
    %v758 = vadd.s32 %v733, 200
    %v759 = vadd.s32 %v733, 208
    %v760 = vadd.s32 %v733, 216
    %v761 = vadd.s32 %v733, 224
    %v762 = vadd.s32 %v733, 232
    %v763 = vadd.s32 %v733, 240
    %v764 = vadd.s32 %v733, 248
    %v765 = vstv %s103
    %v766 = vadd.s32 %v733, %v765
    %v767 = vadd.s32 %v734, %v765
    %v768 = vadd.s32 %v735, %v765
    %v769 = vadd.s32 %v736, %v765
    %v770 = vadd.s32 %v737, %v765
    %v771 = vadd.s32 %v738, %v765
    %v772 = vadd.s32 %v739, %v765
    %v773 = vadd.s32 %v740, %v765
    %v774 = vadd.s32 %v741, %v765
    %v775 = vadd.s32 %v742, %v765
    %v776 = vadd.s32 %v743, %v765
    %v777 = vadd.s32 %v744, %v765
    %v778 = vadd.s32 %v745, %v765
    %v779 = vadd.s32 %v746, %v765
    %v780 = vadd.s32 %v747, %v765
    %v781 = vadd.s32 %v748, %v765
    %v782 = vadd.s32 %v749, %v765
    %v783 = vadd.s32 %v750, %v765
    %v784 = vadd.s32 %v751, %v765
    %v785 = vadd.s32 %v752, %v765
    %v786 = vadd.s32 %v753, %v765
    %v787 = vadd.s32 %v754, %v765
    %v788 = vadd.s32 %v755, %v765
    %v789 = vadd.s32 %v756, %v765
    %v790 = vadd.s32 %v757, %v765
    %v791 = vadd.s32 %v758, %v765
    %v792 = vadd.s32 %v759, %v765
    %v793 = vadd.s32 %v760, %v765
    %v794 = vadd.s32 %v761, %v765
    %v795 = vadd.s32 %v762, %v765
    %v796 = vadd.s32 %v763, %v765
    %v797 = vadd.s32 %v764, %v765
    %vm798 = vcmp.lt.s32.totalorder %v766, 256
    %vm799 = vcmp.lt.s32.totalorder %v767, 256
    %vm800 = vcmp.lt.s32.totalorder %v768, 256
    %vm801 = vcmp.lt.s32.totalorder %v769, 256
    %vm802 = vcmp.lt.s32.totalorder %v770, 256
    %vm803 = vcmp.lt.s32.totalorder %v771, 256
    %vm804 = vcmp.lt.s32.totalorder %v772, 256
    %vm805 = vcmp.lt.s32.totalorder %v773, 256
    %vm806 = vcmp.lt.s32.totalorder %v774, 256
    %vm807 = vcmp.lt.s32.totalorder %v775, 256
    %vm808 = vcmp.lt.s32.totalorder %v776, 256
    %vm809 = vcmp.lt.s32.totalorder %v777, 256
    %vm810 = vcmp.lt.s32.totalorder %v778, 256
    %vm811 = vcmp.lt.s32.totalorder %v779, 256
    %vm812 = vcmp.lt.s32.totalorder %v780, 256
    %vm813 = vcmp.lt.s32.totalorder %v781, 256
    %vm814 = vcmp.lt.s32.totalorder %v782, 256
    %vm815 = vcmp.lt.s32.totalorder %v783, 256
    %vm816 = vcmp.lt.s32.totalorder %v784, 256
    %vm817 = vcmp.lt.s32.totalorder %v785, 256
    %vm818 = vcmp.lt.s32.totalorder %v786, 256
    %vm819 = vcmp.lt.s32.totalorder %v787, 256
    %vm820 = vcmp.lt.s32.totalorder %v788, 256
    %vm821 = vcmp.lt.s32.totalorder %v789, 256
    %vm822 = vcmp.lt.s32.totalorder %v790, 256
    %vm823 = vcmp.lt.s32.totalorder %v791, 256
    %vm824 = vcmp.lt.s32.totalorder %v792, 256
    %vm825 = vcmp.lt.s32.totalorder %v793, 256
    %vm826 = vcmp.lt.s32.totalorder %v794, 256
    %vm827 = vcmp.lt.s32.totalorder %v795, 256
    %vm828 = vcmp.lt.s32.totalorder %v796, 256
    %vm829 = vcmp.lt.s32.totalorder %v797, 256
    %v830 = vsel %vm798, 1, 0
    %v831 = vsel %vm799, 1, 0
    %v832 = vsel %vm800, 1, 0
    %v833 = vsel %vm801, 1, 0
    %v834 = vsel %vm802, 1, 0
    %v835 = vsel %vm803, 1, 0
    %v836 = vsel %vm804, 1, 0
    %v837 = vsel %vm805, 1, 0
    %v838 = vsel %vm806, 1, 0
    %v839 = vsel %vm807, 1, 0
    %v840 = vsel %vm808, 1, 0
    %v841 = vsel %vm809, 1, 0
    %v842 = vsel %vm810, 1, 0
    %v843 = vsel %vm811, 1, 0
    %v844 = vsel %vm812, 1, 0
    %v845 = vsel %vm813, 1, 0
    %v846 = vsel %vm814, 1, 0
    %v847 = vsel %vm815, 1, 0
    %v848 = vsel %vm816, 1, 0
    %v849 = vsel %vm817, 1, 0
    %v850 = vsel %vm818, 1, 0
    %v851 = vsel %vm819, 1, 0
    %v852 = vsel %vm820, 1, 0
    %v853 = vsel %vm821, 1, 0
    %v854 = vsel %vm822, 1, 0
    %v855 = vsel %vm823, 1, 0
    %v856 = vsel %vm824, 1, 0
    %v857 = vsel %vm825, 1, 0
    %v858 = vsel %vm826, 1, 0
    %v859 = vsel %vm827, 1, 0
    %v860 = vsel %vm828, 1, 0
    %v861 = vsel %vm829, 1, 0
    %vm862 = vcmp.eq.s32.totalorder %v830, 1
    %vm863 = vcmp.eq.s32.totalorder %v831, 1
    %vm864 = vcmp.eq.s32.totalorder %v832, 1
    %vm865 = vcmp.eq.s32.totalorder %v833, 1
    %vm866 = vcmp.eq.s32.totalorder %v834, 1
    %vm867 = vcmp.eq.s32.totalorder %v835, 1
    %vm868 = vcmp.eq.s32.totalorder %v836, 1
    %vm869 = vcmp.eq.s32.totalorder %v837, 1
    %vm870 = vcmp.eq.s32.totalorder %v838, 1
    %vm871 = vcmp.eq.s32.totalorder %v839, 1
    %vm872 = vcmp.eq.s32.totalorder %v840, 1
    %vm873 = vcmp.eq.s32.totalorder %v841, 1
    %vm874 = vcmp.eq.s32.totalorder %v842, 1
    %vm875 = vcmp.eq.s32.totalorder %v843, 1
    %vm876 = vcmp.eq.s32.totalorder %v844, 1
    %vm877 = vcmp.eq.s32.totalorder %v845, 1
    %vm878 = vcmp.eq.s32.totalorder %v846, 1
    %vm879 = vcmp.eq.s32.totalorder %v847, 1
    %vm880 = vcmp.eq.s32.totalorder %v848, 1
    %vm881 = vcmp.eq.s32.totalorder %v849, 1
    %vm882 = vcmp.eq.s32.totalorder %v850, 1
    %vm883 = vcmp.eq.s32.totalorder %v851, 1
    %vm884 = vcmp.eq.s32.totalorder %v852, 1
    %vm885 = vcmp.eq.s32.totalorder %v853, 1
    %vm886 = vcmp.eq.s32.totalorder %v854, 1
    %vm887 = vcmp.eq.s32.totalorder %v855, 1
    %vm888 = vcmp.eq.s32.totalorder %v856, 1
    %vm889 = vcmp.eq.s32.totalorder %v857, 1
    %vm890 = vcmp.eq.s32.totalorder %v858, 1
    %vm891 = vcmp.eq.s32.totalorder %v859, 1
    %vm892 = vcmp.eq.s32.totalorder %v860, 1
    %vm893 = vcmp.eq.s32.totalorder %v861, 1
    %v894 = vsel %vm862, %v668, 0.0
    %v895 = vsel %vm863, %v669, 0.0
    %v896 = vsel %vm864, %v670, 0.0
    %v897 = vsel %vm865, %v671, 0.0
    %v898 = vsel %vm866, %v672, 0.0
    %v899 = vsel %vm867, %v673, 0.0
    %v900 = vsel %vm868, %v674, 0.0
    %v901 = vsel %vm869, %v675, 0.0
    %v902 = vsel %vm870, %v676, 0.0
    %v903 = vsel %vm871, %v677, 0.0
    %v904 = vsel %vm872, %v678, 0.0
    %v905 = vsel %vm873, %v679, 0.0
    %v906 = vsel %vm874, %v680, 0.0
    %v907 = vsel %vm875, %v681, 0.0
    %v908 = vsel %vm876, %v682, 0.0
    %v909 = vsel %vm877, %v683, 0.0
    %v910 = vsel %vm878, %v684, 0.0
    %v911 = vsel %vm879, %v685, 0.0
    %v912 = vsel %vm880, %v686, 0.0
    %v913 = vsel %vm881, %v687, 0.0
    %v914 = vsel %vm882, %v688, 0.0
    %v915 = vsel %vm883, %v689, 0.0
    %v916 = vsel %vm884, %v690, 0.0
    %v917 = vsel %vm885, %v691, 0.0
    %v918 = vsel %vm886, %v692, 0.0
    %v919 = vsel %vm887, %v693, 0.0
    %v920 = vsel %vm888, %v694, 0.0
    %v921 = vsel %vm889, %v695, 0.0
    %v922 = vsel %vm890, %v696, 0.0
    %v923 = vsel %vm891, %v697, 0.0
    %v924 = vsel %vm892, %v698, 0.0
    %v925 = vsel %vm893, %v699, 0.0
    %v926 = vsel %vm862, %v700, 0.0
    %v927 = vsel %vm863, %v701, 0.0
    %v928 = vsel %vm864, %v702, 0.0
    %v929 = vsel %vm865, %v703, 0.0
    %v930 = vsel %vm866, %v704, 0.0
    %v931 = vsel %vm867, %v705, 0.0
    %v932 = vsel %vm868, %v706, 0.0
    %v933 = vsel %vm869, %v707, 0.0
    %v934 = vsel %vm870, %v708, 0.0
    %v935 = vsel %vm871, %v709, 0.0
    %v936 = vsel %vm872, %v710, 0.0
    %v937 = vsel %vm873, %v711, 0.0
    %v938 = vsel %vm874, %v712, 0.0
    %v939 = vsel %vm875, %v713, 0.0
    %v940 = vsel %vm876, %v714, 0.0
    %v941 = vsel %vm877, %v715, 0.0
    %v942 = vsel %vm878, %v716, 0.0
    %v943 = vsel %vm879, %v717, 0.0
    %v944 = vsel %vm880, %v718, 0.0
    %v945 = vsel %vm881, %v719, 0.0
    %v946 = vsel %vm882, %v720, 0.0
    %v947 = vsel %vm883, %v721, 0.0
    %v948 = vsel %vm884, %v722, 0.0
    %v949 = vsel %vm885, %v723, 0.0
    %v950 = vsel %vm886, %v724, 0.0
    %v951 = vsel %vm887, %v725, 0.0
    %v952 = vsel %vm888, %v726, 0.0
    %v953 = vsel %vm889, %v727, 0.0
    %v954 = vsel %vm890, %v728, 0.0
    %v955 = vsel %vm891, %v729, 0.0
    %v956 = vsel %vm892, %v730, 0.0
    %v957 = vsel %vm893, %v731, 0.0
    %v958 = vadd.f32 %v894, %v895
    %v959 = vadd.f32 %v958, %v896
    %v960 = vadd.f32 %v959, %v897
    %v961 = vadd.f32 %v960, %v898
    %v962 = vadd.f32 %v961, %v899
    %v963 = vadd.f32 %v962, %v900
    %v964 = vadd.f32 %v963, %v901
    %v965 = vadd.f32 %v964, %v902
    %v966 = vadd.f32 %v965, %v903
    %v967 = vadd.f32 %v966, %v904
    %v968 = vadd.f32 %v967, %v905
    %v969 = vadd.f32 %v968, %v906
    %v970 = vadd.f32 %v969, %v907
    %v971 = vadd.f32 %v970, %v908
    %v972 = vadd.f32 %v971, %v909
    %v973 = vadd.f32 %v972, %v910
    %v974 = vadd.f32 %v973, %v911
    %v975 = vadd.f32 %v974, %v912
    %v976 = vadd.f32 %v975, %v913
    %v977 = vadd.f32 %v976, %v914
    %v978 = vadd.f32 %v977, %v915
    %v979 = vadd.f32 %v978, %v916
    %v980 = vadd.f32 %v979, %v917
    %v981 = vadd.f32 %v980, %v918
    %v982 = vadd.f32 %v981, %v919
    %v983 = vadd.f32 %v982, %v920
    %v984 = vadd.f32 %v983, %v921
    %v985 = vadd.f32 %v984, %v922
    %v986 = vadd.f32 %v985, %v923
    %v987 = vadd.f32 %v986, %v924
    %v988 = vadd.f32 %v987, %v925
    %v989 = vrot.slane %v988, 4
    %v990 = vadd.f32 %v988, %v989
    %v991 = vrot.slane %v990, 2
    %v992 = vadd.f32 %v990, %v991
    %v993 = vrot.slane %v992, 1
    %v994 = vadd.f32 %v992, %v993
    %v995 = vadd.f32 %v926, %v927
    %v996 = vadd.f32 %v995, %v928
    %v997 = vadd.f32 %v996, %v929
    %v998 = vadd.f32 %v997, %v930
    %v999 = vadd.f32 %v998, %v931
    %v1000 = vadd.f32 %v999, %v932
    %v1001 = vadd.f32 %v1000, %v933
    %v1002 = vadd.f32 %v1001, %v934
    %v1003 = vadd.f32 %v1002, %v935
    %v1004 = vadd.f32 %v1003, %v936
    %v1005 = vadd.f32 %v1004, %v937
    %v1006 = vadd.f32 %v1005, %v938
    %v1007 = vadd.f32 %v1006, %v939
    %v1008 = vadd.f32 %v1007, %v940
    %v1009 = vadd.f32 %v1008, %v941
    %v1010 = vadd.f32 %v1009, %v942
    %v1011 = vadd.f32 %v1010, %v943
    %v1012 = vadd.f32 %v1011, %v944
    %v1013 = vadd.f32 %v1012, %v945
    %v1014 = vadd.f32 %v1013, %v946
    %v1015 = vadd.f32 %v1014, %v947
    %v1016 = vadd.f32 %v1015, %v948
    %v1017 = vadd.f32 %v1016, %v949
    %v1018 = vadd.f32 %v1017, %v950
    %v1019 = vadd.f32 %v1018, %v951
    %v1020 = vadd.f32 %v1019, %v952
    %v1021 = vadd.f32 %v1020, %v953
    %v1022 = vadd.f32 %v1021, %v954
    %v1023 = vadd.f32 %v1022, %v955
    %v1024 = vadd.f32 %v1023, %v956
    %v1025 = vadd.f32 %v1024, %v957
    %v1026 = vrot.slane %v1025, 4
    %v1027 = vadd.f32 %v1025, %v1026
    %v1028 = vrot.slane %v1027, 2
    %v1029 = vadd.f32 %v1027, %v1028
    %v1030 = vrot.slane %v1029, 1
    %v1031 = vadd.f32 %v1029, %v1030
    %vm1034 = vcmask 1041409
    %v1035 = vsel %vm1034, %v1031, %v994
    %v1037 = vadd.f32 %v33, %v1035
    %1038 = vst [vmem:[#allocation2] sm:$0x3] %v1037
    // Predicated region
    $region34: #{encoder_cnn_forward.1} parent=1 // pred_check
      %p1039 = pneg %p28
    $region35: #{encoder_cnn_forward.1} parent=1 // pred_check_branch
      %1041 = sbr.rel (%p1039) target = $region37
    $region36: #{encoder_cnn_forward.1} parent=1 // pred_region
      %v1042 = vld [vmem:[#allocation2] sm:$0x3]
      %v1043 = vmul.f32 %v1042, 0.00390625
      %v1044 = vld [vmem:[%s3] sm:$0xff]
      %v1045 = vld [vmem:[%s3 + $0x8] sm:$0xff]
      %v1046 = vld [vmem:[%s3 + $0x10] sm:$0xff]
      %v1047 = vld [vmem:[%s3 + $0x18] sm:$0xff]
      %v1048 = vld [vmem:[%s3 + $0x20] sm:$0xff]
      %v1049 = vld [vmem:[%s3 + $0x28] sm:$0xff]
      %v1050 = vld [vmem:[%s3 + $0x30] sm:$0xff]
      %v1051 = vld [vmem:[%s3 + $0x38] sm:$0xff]
      %v1052 = vld [vmem:[%s3 + $0x40] sm:$0xff]
      %v1053 = vld [vmem:[%s3 + $0x48] sm:$0xff]
      %v1054 = vld [vmem:[%s3 + $0x50] sm:$0xff]
      %v1055 = vld [vmem:[%s3 + $0x58] sm:$0xff]
      %v1056 = vld [vmem:[%s3 + $0x60] sm:$0xff]
      %v1057 = vld [vmem:[%s3 + $0x68] sm:$0xff]
      %v1058 = vld [vmem:[%s3 + $0x70] sm:$0xff]
      %v1059 = vld [vmem:[%s3 + $0x78] sm:$0xff]
      %v1060 = vld [vmem:[%s4] sm:$0x1]
      %v1062 = vlaneseq
      %v1063 = vshrl.u32 %v1062, 7
      %v1064 = vsub.s32 0, %v1063
      %v1065 = vrot.slane %v1060, %v1064
      %1067 = vmatprep.subr.mxu0 0.0
      %1068 = vmatpush1.msra.mxu0 %v1044
      %1069 = vmatprep.subr.mxu0 0.0
      %1070 = vmatpush1.msra.mxu0 %v1045
      %1071 = vmatprep.subr.mxu0 0.0
      %1072 = vmatpush1.msra.mxu0 %v1046
      %1073 = vmatprep.subr.mxu0 0.0
      %1074 = vmatpush1.msra.mxu0 %v1047
      %1075 = vmatprep.subr.mxu0 0.0
      %1076 = vmatpush1.msra.mxu0 %v1048
      %1077 = vmatprep.subr.mxu0 0.0
      %1078 = vmatpush1.msra.mxu0 %v1049
      %1079 = vmatprep.subr.mxu0 0.0
      %1080 = vmatpush1.msra.mxu0 %v1050
      %1081 = vmatprep.subr.mxu0 0.0
      %1082 = vmatpush1.msra.mxu0 %v1051
      %1083 = vmatprep.subr.mxu0 0.0
      %1084 = vmatpush1.msra.mxu0 %v1052
      %1085 = vmatprep.subr.mxu0 0.0
      %1086 = vmatpush1.msra.mxu0 %v1053
      %1087 = vmatprep.subr.mxu0 0.0
      %1088 = vmatpush1.msra.mxu0 %v1054
      %1089 = vmatprep.subr.mxu0 0.0
      %1090 = vmatpush1.msra.mxu0 %v1055
      %1091 = vmatprep.subr.mxu0 0.0
      %1092 = vmatpush1.msra.mxu0 %v1056
      %1093 = vmatprep.subr.mxu0 0.0
      %1094 = vmatpush1.msra.mxu0 %v1057
      %1095 = vmatprep.subr.mxu0 0.0
      %1096 = vmatpush1.msra.mxu0 %v1058
      %1097 = vmatprep.subr.mxu0 0.0
      %1098 = vmatpush1.msra.mxu0 %v1059
      %1099 = vmatprep.subr.mxu0 0.0
      %1100 = vmatpush1.msra.mxu0 0.0
      %1101 = vmatprep.subr.mxu0 0.0
      %1102 = vmatpush1.msra.mxu0 0.0
      %1103 = vmatprep.subr.mxu0 0.0
      %1104 = vmatpush1.msra.mxu0 0.0
      %1105 = vmatprep.subr.mxu0 0.0
      %1106 = vmatpush1.msra.mxu0 0.0
      %1107 = vmatprep.subr.mxu0 0.0
      %1108 = vmatpush1.msra.mxu0 0.0
      %1109 = vmatprep.subr.mxu0 0.0
      %1110 = vmatpush1.msra.mxu0 0.0
      %1111 = vmatprep.subr.mxu0 0.0
      %1112 = vmatpush1.msra.mxu0 0.0
      %1113 = vmatprep.subr.mxu0 0.0
      %1114 = vmatpush1.msra.mxu0 0.0
      %1115 = vmatprep.subr.mxu0 0.0
      %1116 = vmatpush1.msra.mxu0 0.0
      %1117 = vmatprep.subr.mxu0 0.0
      %1118 = vmatpush1.msra.mxu0 0.0
      %1119 = vmatprep.subr.mxu0 0.0
      %1120 = vmatpush1.msra.mxu0 0.0
      %1121 = vmatprep.subr.mxu0 0.0
      %1122 = vmatpush1.msra.mxu0 0.0
      %1123 = vmatprep.subr.mxu0 0.0
      %1124 = vmatpush1.msra.mxu0 0.0
      %1125 = vmatprep.subr.mxu0 0.0
      %1126 = vmatpush1.msra.mxu0 0.0
      %1127 = vmatprep.subr.mxu0 0.0
      %1128 = vmatpush1.msra.mxu0 0.0
      %1129 = vmatprep.subr.mxu0 0.0
      %1130 = vmatpush1.msra.mxu0 0.0
      %1131 = vmatprep.mubr.f32.mxu0 0.0
      %1132 = vmatmul.mubr.f32.gmra.mrb[0].mxu0 %v1043
      %v1133 = vpop.f32.mrb[0].mxu0
      %v1134 = vadd.f32 %v1065, %v1133
      %v1135 = vpop.f32.mrb[0].mxu0
      %1136 = vdwg.mxu0
      %vm1137 = vcmask 254976
      %v1138 = vsel %vm1137, %v1134, 0.0
      %v1139 = vrot.slane %v1138, 4
      %v1140 = vadd.f32 %v1138, %v1139
      %v1141 = vrot.slane %v1140, 2
      %v1142 = vadd.f32 %v1140, %v1141
      %v1143 = vrot.slane %v1142, 1
      %v1144 = vadd.f32 %v1142, %v1143
      %v1145 = vrcp.pop 2.0
      %v1146 = vmul.f32 %v1144, %v1145
      %v1147 = vsub.f32 %v1134, %v1146
      %v1148 = vmul.f32 %v1147, %v1147
      %v1149 = vsel %vm1137, %v1148, 0.0
      %v1150 = vrot.slane %v1149, 4
      %v1151 = vadd.f32 %v1149, %v1150
      %v1152 = vrot.slane %v1151, 2
      %v1153 = vadd.f32 %v1151, %v1152
      %v1154 = vrot.slane %v1153, 1
      %v1155 = vadd.f32 %v1153, %v1154
      %v1156 = vmul.f32 %v1155, %v1145
      %v1157 = vld [vmem:[%s5] sm:$0x1]
      %v1159 = vlaneseq
      %v1160 = vshrl.u32 %v1159, 7
      %v1161 = vsub.s32 0, %v1160
      %v1162 = vrot.slane %v1157, %v1161
      %v1164 = vmul.f32 %v1162, %v1147
      %v1165 = vadd.f32 %v1156, 1e-05
      %v1166 = vrsqrt.pop %v1165
      %v1167 = vmul.f32 %v1164, %v1166
      %v1168 = vld [vmem:[%s6] sm:$0x1]
      %v1170 = vlaneseq
      %v1171 = vshrl.u32 %v1170, 7
      %v1172 = vsub.s32 0, %v1171
      %v1173 = vrot.slane %v1168, %v1172
      %v1175 = vadd.f32 %v1167, %v1173
      %1176 = vst.msk [vmem:[#allocation3] sm:$0x3] %vm1137, %v1175
    $region37: #{encoder_cnn_forward.1} parent=1 // pred_fallthru
      _
    // Predicated region
    $region38: #{encoder_cnn_forward.1} parent=1 // pred_check
      _
    $region39: #{encoder_cnn_forward.1} parent=1 // pred_check_branch
      %1178 = sbr.rel (0) target = $region41
    $region40: #{encoder_cnn_forward.1} parent=1 // pred_region
      %s1180 = ssub.s32 32, 32
      %1181 = vsyncadd [#allocation4], %s1180
      %s1183 = sshll.u32 [#allocation3], 4
      %s1184 = int_to_ptr.vmem [resolvable:$true] %s1183
      %1186 = dma.vmem_to_hbm [thread:$0]  %s1184, 32, %s7, [#allocation4]
    $region41: #{encoder_cnn_forward.1} parent=1 // pred_fallthru
      _
    // Predicated region
    $region42: #{encoder_cnn_forward.1} parent=1 // pred_check
      _
    $region43: #{encoder_cnn_forward.1} parent=1 // pred_check_branch
      %1188 = sbr.rel (0) target = $region45
    $region44: #{encoder_cnn_forward.1} parent=1 // pred_region
      %1189 = dma.done [#allocation4], 32
    $region45: #{encoder_cnn_forward.1} parent=1 // pred_fallthru
      _
    %1190 = vsyncpa [#allocation4], 1

</llo_original>
